<compile_context>
chip_gen: v7x
topology: tpu7x:2x2x1
jax: 0.10.0
libtpu: 0.0.40
codegen_flags: <defaults>
</compile_context>

<pallas_src>
import functools

import jax
import jax.numpy as jnp
from jax.experimental import pallas as pl
from jax.experimental.pallas import tpu as pltpu

LN_EPS = 1e-5
_LANE = 128


def _round_up(x, m):
    return ((x + m - 1) // m) * m


def _vmem_budget_bytes():
    """Per-generation VMEM limit with headroom (v7x ~54 MiB, v5e/v6e ~109 MiB)."""
    try:
        cap = int(pltpu.get_tpu_info().vmem_capacity_bytes)
    except Exception:
        cap = 64 * 1024 * 1024  # conservative fallback, valid on every generation
    return int(cap * 0.85)


def _ctc_head_kernel(x_ref, gamma_ref, beta_ref, w_ref, b_ref, o_ref, xn_ref):
    """One (row-tile i, vocab-tile j) grid step.

    x_ref: (tm, D) rows; gamma/beta: (1, D); w: (D, tn); b: (1, tn); o: (tm, tn).
    xn_ref: (tm, D) VMEM scratch holding the LayerNorm'd rows (computed at j==0).
    """
    j = pl.program_id(1)

    @pl.when(j == 0)
    def _():
        x = x_ref[...].astype(jnp.float32)
        # LayerNorm over the feature axis (torch.nn.LayerNorm(input_dim), eps=1e-5).
        mean = jnp.mean(x, axis=-1, keepdims=True)
        centered = x - mean
        var = jnp.mean(centered * centered, axis=-1, keepdims=True)
        xn = centered * jax.lax.rsqrt(var + LN_EPS)
        xn = xn * gamma_ref[...].astype(jnp.float32) + beta_ref[...].astype(jnp.float32)
        # Dropout is identity at inference time.
        # TODO(synk): training-mode dropout (pltpu.prng_random_bits mask) not implemented.
        xn_ref[...] = xn.astype(xn_ref.dtype)

    # Projection: native-dtype MXU matmul (bf16 stays bf16), f32 accumulation.
    logits = jnp.dot(xn_ref[...], w_ref[...], preferred_element_type=jnp.float32)
    logits = logits + b_ref[...].astype(jnp.float32)
    o_ref[...] = logits.astype(o_ref.dtype)


def prepare_ctc_head_params(weight, bias, gamma, beta, compute_dtype=None):
    """One-time (init) parameter prep — hoisted out of the per-call jitted path.

    weight: (V+1, D) torch-layout projection weight; bias: (V+1,);
    gamma/beta: (D,) LayerNorm params.
    Transposes to (D, V+1), pads the vocab axis to a multiple of 128 (lane-dense
    kernel stores) and optionally casts to the inference compute dtype (bf16).
    Returns (gamma, beta, w_t_padded, bias_padded, out_vocab).
    """
    vp, _ = weight.shape
    vp_pad = _round_up(vp, _LANE)
    w_t = weight.T
    if vp_pad != vp:
        w_t = jnp.pad(w_t, ((0, 0), (0, vp_pad - vp)))
        bias = jnp.pad(bias, (0, vp_pad - vp))
    if compute_dtype is not None:
        w_t = w_t.astype(compute_dtype)
        bias = bias.astype(compute_dtype)
        gamma = gamma.astype(compute_dtype)
        beta = beta.astype(compute_dtype)
    return gamma, beta, w_t, bias, int(vp)


@functools.partial(jax.jit, static_argnames=("block_rows", "vocab_tile", "out_vocab"))
def advanced_ctc_head(x, gamma, beta, w_t, bias, *, block_rows=None,
                      vocab_tile=None, out_vocab=None):
    """
    Args:
        x:     (B, T, D) encoder outputs
        gamma: (D,)  LayerNorm weight
        beta:  (D,)  LayerNorm bias
        w_t:   (D, Vp) projection weight, transposed (ideally vocab pre-padded to 128)
        bias:  (Vp,) projection bias
        out_vocab: true V+1 (static); defaults to w_t.shape[1]
    Returns:
        logits: (B, T, out_vocab)
    """
    B, T, D = x.shape
    vp_in = w_t.shape[1]
    if out_vocab is None:
        out_vocab = vp_in
    N = B * T

    # Lane-dense vocab padding. No-op (no HBM traffic) when params were pre-padded
    # via prepare_ctc_head_params.
    vp_pad = _round_up(vp_in, _LANE)
    w_p = w_t if vp_pad == vp_in else jnp.pad(w_t, ((0, 0), (0, vp_pad - vp_in)))
    b_p = bias if vp_pad == vp_in else jnp.pad(bias, (0, vp_pad - vp_in))

    x2d = x.reshape(N, D)
    gamma2d = gamma.reshape(1, D)
    beta2d = beta.reshape(1, D)
    bias2d = b_p.reshape(1, vp_pad)

    out_dtype = x.dtype
    x_it = jnp.dtype(x.dtype).itemsize
    w_it = jnp.dtype(w_p.dtype).itemsize
    o_it = jnp.dtype(out_dtype).itemsize
    b_it = jnp.dtype(b_p.dtype).itemsize
    g_it = jnp.dtype(gamma.dtype).itemsize

    # Sub-32-bit dtypes pack along sublanes: bf16 needs 16-row tiles, 8-bit 32-row.
    row_align = {4: 8, 2: 16, 1: 32}[min(x_it, w_it, o_it)]

    if block_rows is None:
        # Small vocab -> HBM-bound on the x read: use big row tiles.
        block_rows = 1024 if vp_pad <= 512 else (512 if vp_pad <= 2048 else 256)

    tm = min(block_rows, _round_up(N, row_align))
    tm = max(row_align, (tm // row_align) * row_align)

    vmem_limit = _vmem_budget_bytes()
    budget = int(vmem_limit * 0.9)

    def footprint(tm_, tn_):
        n_vt = pl.cdiv(vp_pad, tn_)
        const_bufs = 1 if n_vt == 1 else 2  # weight/bias single-buffered when resident
        return (D * tn_ * w_it * const_bufs          # W tile
                + tn_ * b_it * const_bufs            # bias tile
                + 2 * tm_ * tn_ * o_it               # output tile (double-buffered)
                + 2 * tm_ * D * x_it                 # x tile (double-buffered)
                + tm_ * D * w_it                     # LayerNorm scratch
                + 2 * D * g_it)                      # gamma + beta

    if vocab_tile is not None:
        tn = max(_LANE, min(_round_up(vocab_tile, _LANE), vp_pad))
    else:
        tn = vp_pad  # prefer a fully resident (single-buffered) weight
        if footprint(tm, tn) > budget:
            tn = min(2048, vp_pad)
        while footprint(tm, tn) > budget and tn > _LANE:
            tn = max(_LANE, _round_up(tn // 2, _LANE))
    while footprint(tm, tn) > budget and tm > row_align:
        tm = max(row_align, (tm // 2 // row_align) * row_align)

    n_row_tiles = pl.cdiv(N, tm)
    n_vocab_tiles = pl.cdiv(vp_pad, tn)

    # Single-buffer specs whose block index never changes (constant residency).
    if n_vocab_tiles == 1:
        w_spec = pl.BlockSpec((D, tn), lambda i, j: (0, j), pipeline_mode=pl.Buffered(1))
        b_spec = pl.BlockSpec((1, tn), lambda i, j: (0, j), pipeline_mode=pl.Buffered(1))
    else:
        w_spec = pl.BlockSpec((D, tn), lambda i, j: (0, j))
        b_spec = pl.BlockSpec((1, tn), lambda i, j: (0, j))
    ln_w_spec = pl.BlockSpec((1, D), lambda i, j: (0, 0), pipeline_mode=pl.Buffered(1))
    ln_b_spec = pl.BlockSpec((1, D), lambda i, j: (0, 0), pipeline_mode=pl.Buffered(1))

    cost = pl.CostEstimate(
        flops=2 * N * D * vp_pad + 6 * N * D,            # matmul + LayerNorm
        transcendentals=N,                               # one rsqrt per row
        bytes_accessed=(N * D * x_it
                        + D * vp_pad * w_it * (1 if n_vocab_tiles == 1 else n_row_tiles)
                        + N * vp_pad * o_it),
    )

    out2d = pl.pallas_call(
        _ctc_head_kernel,
        out_shape=jax.ShapeDtypeStruct((N, vp_pad), out_dtype),
        grid_spec=pltpu.PrefetchScalarGridSpec(
            num_scalar_prefetch=0,
            grid=(n_row_tiles, n_vocab_tiles),
            in_specs=[
                pl.BlockSpec((tm, D), lambda i, j: (i, 0)),   # x row tile (resident over j)
                ln_w_spec,                                    # gamma
                ln_b_spec,                                    # beta
                w_spec,                                       # W^T vocab tile
                b_spec,                                       # bias vocab tile
            ],
            out_specs=pl.BlockSpec((tm, tn), lambda i, j: (i, j)),
            scratch_shapes=[pltpu.VMEM((tm, D), w_p.dtype)],  # LayerNorm'd rows cache
        ),
        compiler_params=pltpu.CompilerParams(
            dimension_semantics=("parallel", "arbitrary"),
            vmem_limit_bytes=vmem_limit,
        ),
        cost_estimate=cost,
    )(x2d, gamma2d, beta2d, w_p, bias2d)

    if vp_pad != out_vocab:
        out2d = out2d[:, :out_vocab]
    return out2d.reshape(B, T, out_vocab)


def _xavier_uniform(key, shape, dtype=jnp.float32):
    # torch.nn.init.xavier_uniform_ on a (fan_out, fan_in) Linear weight
    fan_out, fan_in = shape
    limit = (6.0 / (fan_in + fan_out)) ** 0.5
    return jax.random.uniform(key, shape, dtype=dtype, minval=-limit, maxval=limit)


def _ref_fn(x, gamma, beta, w, bias):
    mean = jnp.mean(x, axis=-1, keepdims=True)
    var = jnp.mean((x - mean) ** 2, axis=-1, keepdims=True)
    xn = (x - mean) / jnp.sqrt(var + LN_EPS) * gamma + beta
    return xn @ w.T + bias


if __name__ == "__main__":
    # ---- Test 1: small char-level head, f32, fully resident weight ----
    B, T, D = 2, 8, 32
    vocab_size = 15
    Vp = vocab_size + 1  # CTC blank

    key = jax.random.PRNGKey(0)
    kx, kw, kx2 = jax.random.split(key, 3)

    x = jax.random.normal(kx, (B, T, D), dtype=jnp.float32)
    gamma = jnp.ones((D,), jnp.float32)          # LayerNorm weight
    beta = jnp.zeros((D,), jnp.float32)          # LayerNorm bias
    w = _xavier_uniform(kw, (Vp, D))             # projection.weight (V+1, D)
    bias = jnp.zeros((Vp,), jnp.float32)         # projection.bias

    # One-time param prep (vocab padding hoisted out of the forward path).
    g_p, b_ln_p, w_p, bias_p, ov = prepare_ctc_head_params(w, bias, gamma, beta)

    logits = advanced_ctc_head(x, g_p, b_ln_p, w_p, bias_p, out_vocab=ov)
    jax.block_until_ready(logits)

    ref = _ref_fn(x, gamma, beta, w, bias)
    assert logits.shape == (B, T, Vp)
    assert jnp.allclose(logits, ref, atol=1e-4, rtol=1e-4)

    # ---- Test 2: bf16 inference path (native bf16 MXU matmul, f32 accumulation) ----
    g_bf, b_ln_bf, w_bf, bias_bf, _ = prepare_ctc_head_params(
        w, bias, gamma, beta, compute_dtype=jnp.bfloat16)
    logits_bf16 = advanced_ctc_head(
        x.astype(jnp.bfloat16), g_bf, b_ln_bf, w_bf, bias_bf, out_vocab=ov)
    jax.block_until_ready(logits_bf16)
    assert jnp.allclose(logits_bf16.astype(jnp.float32), ref, atol=1e-1, rtol=1e-1)

    # ---- Test 3: vocab-tiled path + ragged last row block (no wrapper row pad) ----
    B2, T2, D2 = 2, 13, 64            # N = 26 -> ragged vs the 32-row tile
    V2p = 301                         # padded to 384 -> 3 vocab tiles of 128
    x2 = jax.random.normal(kx2, (B2, T2, D2), dtype=jnp.float32)
    g2 = jnp.full((D2,), 0.9, jnp.float32)
    be2 = jnp.full((D2,), 0.05, jnp.float32)
    w2 = _xavier_uniform(jax.random.PRNGKey(7), (V2p, D2))
    bias2 = jnp.linspace(-0.1, 0.1, V2p, dtype=jnp.float32)

    g2p, be2p, w2p, bias2p, ov2 = prepare_ctc_head_params(w2, bias2, g2, be2)
    logits2 = advanced_ctc_head(x2, g2p, be2p, w2p, bias2p, out_vocab=ov2, vocab_tile=128)
    jax.block_until_ready(logits2)

    ref2 = _ref_fn(x2, g2, be2, w2, bias2)
    assert logits2.shape == (B2, T2, V2p)
    assert jnp.allclose(logits2, ref2, atol=1e-3, rtol=1e-3)

    print("KERNEL_OK")
</pallas_src>

<mosaic_0001>
module attributes {stable_mosaic.version = 11 : i64} {
  func.func @_ctc_head_kernel(%arg0: i32, %arg1: i32, %arg2: memref<16x32xf32, #tpu.memory_space<vmem>>, %arg3: memref<1x32xf32, #tpu.memory_space<vmem>>, %arg4: memref<1x32xf32, #tpu.memory_space<vmem>>, %arg5: memref<32x128xf32, #tpu.memory_space<vmem>>, %arg6: memref<1x128xf32, #tpu.memory_space<vmem>>, %arg7: memref<16x128xf32, #tpu.memory_space<vmem>>, %arg8: memref<16x32xf32, #tpu.memory_space<vmem>>) attributes {dimension_semantics = [#tpu.dimension_semantics<parallel>, #tpu.dimension_semantics<arbitrary>], iteration_bounds = array<i64: 1, 1>, scalar_prefetch = 0 : i64, scratch_operands = 1 : i64, tpu.core_type = #tpu.core_type<tc>, window_params = [{transform_indices = @transform_0, window_bounds = array<i64: 16, 32>}, {pipeline_mode = #tpu.pipeline_mode<synchronous>, transform_indices = @transform_1, window_bounds = array<i64: 1, 32>}, {pipeline_mode = #tpu.pipeline_mode<synchronous>, transform_indices = @transform_2, window_bounds = array<i64: 1, 32>}, {pipeline_mode = #tpu.pipeline_mode<synchronous>, transform_indices = @transform_3, window_bounds = array<i64: 32, 128>}, {pipeline_mode = #tpu.pipeline_mode<synchronous>, transform_indices = @transform_4, window_bounds = array<i64: 1, 128>}, {transform_indices = @transform_5, window_bounds = array<i64: 16, 128>}]} {
    %c0_i32 = arith.constant 0 : i32
    %0 = arith.cmpi eq, %arg1, %c0_i32 : i32
    %1 = arith.extui %0 : i1 to i32
    %c0_i32_0 = arith.constant 0 : i32
    %2 = arith.cmpi ne, %1, %c0_i32_0 : i32
    scf.if %2 {
      %c0_8 = arith.constant 0 : index
      %c0_9 = arith.constant 0 : index
      %10 = vector.load %arg2[%c0_8, %c0_9] : memref<16x32xf32, #tpu.memory_space<vmem>>, vector<16x32xf32>
      %cst_10 = arith.constant dense<0.000000e+00> : vector<16xf32>
      %11 = vector.multi_reduction <add>, %10, %cst_10 [1] : vector<16x32xf32> to vector<16xf32>
      %12 = vector.shape_cast %11 : vector<16xf32> to vector<16x1xf32>
      %cst_11 = arith.constant 3.200000e+01 : f32
      %13 = vector.broadcast %cst_11 : f32 to vector<16x1xf32>
      %14 = arith.divf %12, %13 : vector<16x1xf32>
      %15 = vector.broadcast %14 : vector<16x1xf32> to vector<16x32xf32>
      %16 = arith.subf %10, %15 : vector<16x32xf32>
      %17 = arith.mulf %16, %16 : vector<16x32xf32>
      %cst_12 = arith.constant dense<0.000000e+00> : vector<16xf32>
      %18 = vector.multi_reduction <add>, %17, %cst_12 [1] : vector<16x32xf32> to vector<16xf32>
      %19 = vector.shape_cast %18 : vector<16xf32> to vector<16x1xf32>
      %cst_13 = arith.constant 3.200000e+01 : f32
      %20 = vector.broadcast %cst_13 : f32 to vector<16x1xf32>
      %21 = arith.divf %19, %20 : vector<16x1xf32>
      %cst_14 = arith.constant 9.99999974E-6 : f32
      %22 = vector.broadcast %cst_14 : f32 to vector<16x1xf32>
      %23 = arith.addf %21, %22 : vector<16x1xf32>
      %24 = math.rsqrt %23 : vector<16x1xf32>
      %25 = vector.broadcast %24 : vector<16x1xf32> to vector<16x32xf32>
      %26 = arith.mulf %16, %25 : vector<16x32xf32>
      %c0_15 = arith.constant 0 : index
      %c0_16 = arith.constant 0 : index
      %27 = vector.load %arg3[%c0_15, %c0_16] : memref<1x32xf32, #tpu.memory_space<vmem>>, vector<1x32xf32>
      %28 = vector.broadcast %27 : vector<1x32xf32> to vector<16x32xf32>
      %29 = arith.mulf %26, %28 : vector<16x32xf32>
      %c0_17 = arith.constant 0 : index
      %c0_18 = arith.constant 0 : index
      %30 = vector.load %arg4[%c0_17, %c0_18] : memref<1x32xf32, #tpu.memory_space<vmem>>, vector<1x32xf32>
      %31 = vector.broadcast %30 : vector<1x32xf32> to vector<16x32xf32>
      %32 = arith.addf %29, %31 : vector<16x32xf32>
      %c0_19 = arith.constant 0 : index
      %c0_20 = arith.constant 0 : index
      %33 = vector.load %arg8[%c0_19, %c0_20] : memref<16x32xf32, #tpu.memory_space<vmem>>, vector<16x32xf32>
      tpu.vector_store %arg8[%c0_19, %c0_20], %32 {strides = array<i32>} : memref<16x32xf32, #tpu.memory_space<vmem>>, vector<16x32xf32>,
    } else {
    }
    %c0 = arith.constant 0 : index
    %c0_1 = arith.constant 0 : index
    %3 = vector.load %arg8[%c0, %c0_1] : memref<16x32xf32, #tpu.memory_space<vmem>>, vector<16x32xf32>
    %c0_2 = arith.constant 0 : index
    %c0_3 = arith.constant 0 : index
    %4 = vector.load %arg5[%c0_2, %c0_3] : memref<32x128xf32, #tpu.memory_space<vmem>>, vector<32x128xf32>
    %cst = arith.constant dense<0.000000e+00> : vector<16x128xf32>
    %5 = tpu.matmul %3, %4, %cst {dimension_numbers = #tpu.dot_dimension_numbers<[1], [0], [0], [1], [0, 0, 1, 1], [], []>} : vector<16x32xf32>, vector<32x128xf32>, vector<16x128xf32> -> vector<16x128xf32>
    %c0_4 = arith.constant 0 : index
    %c0_5 = arith.constant 0 : index
    %6 = vector.load %arg6[%c0_4, %c0_5] : memref<1x128xf32, #tpu.memory_space<vmem>>, vector<1x128xf32>
    %7 = vector.broadcast %6 : vector<1x128xf32> to vector<16x128xf32>
    %8 = arith.addf %5, %7 : vector<16x128xf32>
    %c0_6 = arith.constant 0 : index
    %c0_7 = arith.constant 0 : index
    %9 = vector.load %arg7[%c0_6, %c0_7] : memref<16x128xf32, #tpu.memory_space<vmem>>, vector<16x128xf32>
    tpu.vector_store %arg7[%c0_6, %c0_7], %8 {strides = array<i32>} : memref<16x128xf32, #tpu.memory_space<vmem>>, vector<16x128xf32>,
    return
  }
  func.func @transform_0(%arg0: i32, %arg1: i32) -> (i32, i32) {
    %c0_i32 = arith.constant 0 : i32
    %c0_i32_0 = arith.constant 0 : i32
    return %arg0, %c0_i32 : i32, i32
  }
  func.func @transform_1(%arg0: i32, %arg1: i32) -> (i32, i32) {
    %c0_i32 = arith.constant 0 : i32
    %c0_i32_0 = arith.constant 0 : i32
    %c0_i32_1 = arith.constant 0 : i32
    return %c0_i32, %c0_i32_0 : i32, i32
  }
  func.func @transform_2(%arg0: i32, %arg1: i32) -> (i32, i32) {
    %c0_i32 = arith.constant 0 : i32
    %c0_i32_0 = arith.constant 0 : i32
    %c0_i32_1 = arith.constant 0 : i32
    return %c0_i32, %c0_i32_0 : i32, i32
  }
  func.func @transform_3(%arg0: i32, %arg1: i32) -> (i32, i32) {
    %c0_i32 = arith.constant 0 : i32
    %c0_i32_0 = arith.constant 0 : i32
    return %c0_i32, %arg1 : i32, i32
  }
  func.func @transform_4(%arg0: i32, %arg1: i32) -> (i32, i32) {
    %c0_i32 = arith.constant 0 : i32
    %c0_i32_0 = arith.constant 0 : i32
    return %c0_i32, %arg1 : i32, i32
  }
  func.func @transform_5(%arg0: i32, %arg1: i32) -> (i32, i32) {
    %c0_i32 = arith.constant 0 : i32
    return %arg0, %arg1 : i32, i32
  }
}

</mosaic_0001>

<llo_original>
// kernel: advanced_ctc_head.1
$region0: #{advanced_ctc_head.1}
  #allocation0 [shape = 'u32[]', space=smem, size = 0x4, offset = 0x4, fixed_abs, tag = 'smem constant byte address 0x4 - core index']
  #allocation1 [shape = 'u32[144,128]{1,0:T(1,128)}', space=vmem, size = 0x12000, scoped, tag = 'internal scratch']
  #allocation2 [shape = 'f32[16,32]{1,0:T(8,128)}', space=vmem, size = 0x2000, scoped, tag = 'scratch operand']
  %s0 = inlined_call_operand.hbm [shape: f32[16,32], index: 0, kind: input, shape index: {}]
  %s1 = inlined_call_operand.vmem [shape: f32[1,32], index: 1, kind: input, shape index: {}]
  %s2 = inlined_call_operand.vmem [shape: f32[1,32], index: 2, kind: input, shape index: {}]
  %s3 = inlined_call_operand.hbm [shape: f32[32,128], index: 3, kind: input, shape index: {}]
  %s4 = inlined_call_operand.vmem [shape: f32[1,128], index: 4, kind: input, shape index: {}]
  %s5 = inlined_call_operand.vmem [shape: f32[16,128], index: 5, kind: output, shape index: {}]
  %s6 = sld [smem:[#allocation0]]
  $region42: #{advanced_ctc_head.1} parent=0
    _
  %s8 = ssub.s32 1, %s6
  %s9 = scalar_select 0, %s8, %s6
  $region1: #{advanced_ctc_head.1} parent=0
    #allocation3 [shape = 'u8[8192]{0}', space=vmem, size = 0x2000, scoped, tag = 'input window, operand 0, single buffered']
    #allocation4 [shape = 's32[1]{0}', space=sflag, size = 0x4, scoped, tag = 'scoped memory for advanced_ctc_head.1']
    #allocation5 [shape = 'u8[16384]{0}', space=vmem, size = 0x4000, scoped, tag = 'input window, operand 3, single buffered']
    #allocation6 [shape = 's32[1]{0}', space=sflag, size = 0x4, scoped, tag = 'scoped memory for advanced_ctc_head.1']
    %10 = vsyncpa [#allocation4], 0
    %11 = vsyncpa [#allocation6], 0
    // Predicated region
    $region2: #{advanced_ctc_head.1} parent=1 // pred_check
      _
    $region3: #{advanced_ctc_head.1} parent=1 // pred_check_branch
      %13 = sbr.rel (0) target = $region5
    $region4: #{advanced_ctc_head.1} parent=1 // pred_region
      %s15 = ssub.s32 256, 256
      %16 = vsyncadd [#allocation4], %s15
      %s17 = sshll.u32 [#allocation3], 4
      %s18 = int_to_ptr.vmem [resolvable:$true] %s17
      %23 = dma.hbm_to_vmem [thread:$0]  %s0, 256, %s18, [#allocation4], 128, 128, 8
    $region5: #{advanced_ctc_head.1} parent=1 // pred_fallthru
      _
    // Predicated region
    $region6: #{advanced_ctc_head.1} parent=1 // pred_check
      _
    $region7: #{advanced_ctc_head.1} parent=1 // pred_check_branch
      %25 = sbr.rel (0) target = $region9
    $region8: #{advanced_ctc_head.1} parent=1 // pred_region
      _
    $region9: #{advanced_ctc_head.1} parent=1 // pred_fallthru
      _
    // Predicated region
    $region10: #{advanced_ctc_head.1} parent=1 // pred_check
      _
    $region11: #{advanced_ctc_head.1} parent=1 // pred_check_branch
      %27 = sbr.rel (0) target = $region13
    $region12: #{advanced_ctc_head.1} parent=1 // pred_region
      _
    $region13: #{advanced_ctc_head.1} parent=1 // pred_fallthru
      _
    // Predicated region
    $region14: #{advanced_ctc_head.1} parent=1 // pred_check
      _
    $region15: #{advanced_ctc_head.1} parent=1 // pred_check_branch
      %29 = sbr.rel (0) target = $region17
    $region16: #{advanced_ctc_head.1} parent=1 // pred_region
      %s31 = ssub.s32 512, 512
      %32 = vsyncadd [#allocation6], %s31
      %s33 = sshll.u32 [#allocation5], 4
      %s34 = int_to_ptr.vmem [resolvable:$true] %s33
      %39 = dma.hbm_to_vmem [thread:$0]  %s3, 512, %s34, [#allocation6], 128, 128, 8
    $region17: #{advanced_ctc_head.1} parent=1 // pred_fallthru
      _
    // Predicated region
    $region18: #{advanced_ctc_head.1} parent=1 // pred_check
      _
    $region19: #{advanced_ctc_head.1} parent=1 // pred_check_branch
      %41 = sbr.rel (0) target = $region21
    $region20: #{advanced_ctc_head.1} parent=1 // pred_region
      _
    $region21: #{advanced_ctc_head.1} parent=1 // pred_fallthru
      _
    // Predicated region
    $region22: #{advanced_ctc_head.1} parent=1 // pred_check
      _
    $region23: #{advanced_ctc_head.1} parent=1 // pred_check_branch
      %43 = sbr.rel (0) target = $region25
    $region24: #{advanced_ctc_head.1} parent=1 // pred_region
      %44 = dma.done [#allocation4], 256
    $region25: #{advanced_ctc_head.1} parent=1 // pred_fallthru
      _
    // Predicated region
    $region26: #{advanced_ctc_head.1} parent=1 // pred_check
      _
    $region27: #{advanced_ctc_head.1} parent=1 // pred_check_branch
      %46 = sbr.rel (0) target = $region29
    $region28: #{advanced_ctc_head.1} parent=1 // pred_region
      %47 = dma.done [#allocation6], 512
    $region29: #{advanced_ctc_head.1} parent=1 // pred_fallthru
      _
    %p48 = scmp.eq.s32.totalorder 0, 0
    // Predicated region
    $region30: #{advanced_ctc_head.1} parent=1 // pred_check
      %p49 = pneg %p48
    $region31: #{advanced_ctc_head.1} parent=1 // pred_check_branch
      %51 = sbr.rel (%p49) target = $region33
    $region32: #{advanced_ctc_head.1} parent=1 // pred_region
      %v52 = vld [vmem:[#allocation3] sm:$0xff]
      %v53 = vld [vmem:[#allocation3 + $0x8] sm:$0xff]
      %vm54 = vcmask 261120
      %v55 = vsel %vm54, %v52, 0.0
      %56 = vadd.xlane.f32.xlu0 %v55
      %v57 = vpop.xlane.xlu0 %56
      %v58 = vsel %vm54, %v53, 0.0
      %59 = vadd.xlane.f32.xlu0 %v58
      %v60 = vpop.xlane.xlu0 %59
      %v61 = vrcp.pop 32.0
      %v62 = vmul.f32 %v57, %v61
      %v63 = vmul.f32 %v60, %v61
      %v64 = vsub.f32 %v52, %v62
      %v65 = vsub.f32 %v53, %v63
      %v66 = vmul.f32 %v64, %v64
      %v67 = vmul.f32 %v65, %v65
      %v68 = vsel %vm54, %v66, 0.0
      %69 = vadd.xlane.f32.xlu0 %v68
      %v70 = vpop.xlane.xlu0 %69
      %v71 = vsel %vm54, %v67, 0.0
      %72 = vadd.xlane.f32.xlu0 %v71
      %v73 = vpop.xlane.xlu0 %72
      %v74 = vmul.f32 %v70, %v61
      %v75 = vmul.f32 %v73, %v61
      %v76 = vadd.f32 %v74, 1e-05
      %v77 = vadd.f32 %v75, 1e-05
      %v78 = vrsqrt.pop %v76
      %v79 = vrsqrt.pop %v77
      %v80 = vmul.f32 %v64, %v78
      %v81 = vmul.f32 %v65, %v79
      %v82 = vld [vmem:[%s1] sm:$0x1]
      %v84 = vlaneseq
      %v85 = vshrl.u32 %v84, 7
      %v86 = vsub.s32 0, %v85
      %v87 = vrot.slane %v82, %v86
      %v89 = vmul.f32 %v80, %v87
      %v90 = vmul.f32 %v81, %v87
      %v91 = vld [vmem:[%s2] sm:$0x1]
      %v93 = vlaneseq
      %v94 = vshrl.u32 %v93, 7
      %v95 = vsub.s32 0, %v94
      %v96 = vrot.slane %v91, %v95
      %v98 = vadd.f32 %v89, %v96
      %v99 = vadd.f32 %v90, %v96
      %100 = vst.msk [vmem:[#allocation2] sm:$0xff] %vm54, %v98
      %101 = vst.msk [vmem:[#allocation2 + $0x8] sm:$0xff] %vm54, %v99
    $region33: #{advanced_ctc_head.1} parent=1 // pred_fallthru
      _
    %v102 = vld [vmem:[#allocation2] sm:$0xff]
    %v103 = vld [vmem:[#allocation2 + $0x8] sm:$0xff]
    %v104 = vld [vmem:[#allocation5] sm:$0xff]
    %v105 = vld [vmem:[#allocation5 + $0x8] sm:$0xff]
    %v106 = vld [vmem:[#allocation5 + $0x10] sm:$0xff]
    %v107 = vld [vmem:[#allocation5 + $0x18] sm:$0xff]
    %v108 = vld [vmem:[%s4] sm:$0x1]
    %v110 = vlaneseq
    %v111 = vshrl.u32 %v110, 7
    %v112 = vsub.s32 0, %v111
    %v113 = vrot.slane %v108, %v112
    %vm115 = vcmask 261120
    %v117 = vsel %vm115, %v102, 0
    %v120 = vsel %vm115, %v103, 0
    %122 = vmatprep.subr.mxu0 0.0
    %123 = vmatpush1.msra.mxu0 %v104
    %124 = vmatprep.subr.mxu0 0.0
    %125 = vmatpush1.msra.mxu0 %v105
    %126 = vmatprep.subr.mxu0 0.0
    %127 = vmatpush1.msra.mxu0 %v106
    %128 = vmatprep.subr.mxu0 0.0
    %129 = vmatpush1.msra.mxu0 %v107
    %130 = vmatprep.subr.mxu0 0.0
    %131 = vmatpush1.msra.mxu0 0.0
    %132 = vmatprep.subr.mxu0 0.0
    %133 = vmatpush1.msra.mxu0 0.0
    %134 = vmatprep.subr.mxu0 0.0
    %135 = vmatpush1.msra.mxu0 0.0
    %136 = vmatprep.subr.mxu0 0.0
    %137 = vmatpush1.msra.mxu0 0.0
    %138 = vmatprep.subr.mxu0 0.0
    %139 = vmatpush1.msra.mxu0 0.0
    %140 = vmatprep.subr.mxu0 0.0
    %141 = vmatpush1.msra.mxu0 0.0
    %142 = vmatprep.subr.mxu0 0.0
    %143 = vmatpush1.msra.mxu0 0.0
    %144 = vmatprep.subr.mxu0 0.0
    %145 = vmatpush1.msra.mxu0 0.0
    %146 = vmatprep.subr.mxu0 0.0
    %147 = vmatpush1.msra.mxu0 0.0
    %148 = vmatprep.subr.mxu0 0.0
    %149 = vmatpush1.msra.mxu0 0.0
    %150 = vmatprep.subr.mxu0 0.0
    %151 = vmatpush1.msra.mxu0 0.0
    %152 = vmatprep.subr.mxu0 0.0
    %153 = vmatpush1.msra.mxu0 0.0
    %154 = vmatprep.subr.mxu0 0.0
    %155 = vmatpush1.msra.mxu0 0.0
    %156 = vmatprep.subr.mxu0 0.0
    %157 = vmatpush1.msra.mxu0 0.0
    %158 = vmatprep.subr.mxu0 0.0
    %159 = vmatpush1.msra.mxu0 0.0
    %160 = vmatprep.subr.mxu0 0.0
    %161 = vmatpush1.msra.mxu0 0.0
    %162 = vmatprep.subr.mxu0 0.0
    %163 = vmatpush1.msra.mxu0 0.0
    %164 = vmatprep.subr.mxu0 0.0
    %165 = vmatpush1.msra.mxu0 0.0
    %166 = vmatprep.subr.mxu0 0.0
    %167 = vmatpush1.msra.mxu0 0.0
    %168 = vmatprep.subr.mxu0 0.0
    %169 = vmatpush1.msra.mxu0 0.0
    %170 = vmatprep.subr.mxu0 0.0
    %171 = vmatpush1.msra.mxu0 0.0
    %172 = vmatprep.subr.mxu0 0.0
    %173 = vmatpush1.msra.mxu0 0.0
    %174 = vmatprep.subr.mxu0 0.0
    %175 = vmatpush1.msra.mxu0 0.0
    %176 = vmatprep.subr.mxu0 0.0
    %177 = vmatpush1.msra.mxu0 0.0
    %178 = vmatprep.subr.mxu0 0.0
    %179 = vmatpush1.msra.mxu0 0.0
    %180 = vmatprep.subr.mxu0 0.0
    %181 = vmatpush1.msra.mxu0 0.0
    %182 = vmatprep.subr.mxu0 0.0
    %183 = vmatpush1.msra.mxu0 0.0
    %184 = vmatprep.subr.mxu0 0.0
    %185 = vmatpush1.msra.mxu0 0.0
    %186 = vmatprep.mubr.f32.mxu0 0.0
    %187 = vmatmul.mubr.f32.gmra.mrb[0].mxu0 %v117
    %v188 = vpop.f32.mrb[0].mxu0
    %v189 = vadd.f32 %v113, %v188
    %v190 = vpop.f32.mrb[0].mxu0
    %191 = vmatprep.mubr.f32.mxu0 0.0
    %192 = vmatmul.mubr.f32.gmra.mrb[0].mxu0 %v120
    %v193 = vpop.f32.mrb[0].mxu0
    %v194 = vadd.f32 %v113, %v193
    %v195 = vpop.f32.mrb[0].mxu0
    %196 = vdwg.mxu0
    %197 = vst [vmem:[%s5] sm:$0xff] %v189
    %198 = vst [vmem:[%s5 + $0x8] sm:$0xff] %v194
    // Predicated region
    $region34: #{advanced_ctc_head.1} parent=1 // pred_check
      _
    $region35: #{advanced_ctc_head.1} parent=1 // pred_check_branch
      %200 = sbr.rel (0) target = $region37
    $region36: #{advanced_ctc_head.1} parent=1 // pred_region
      _
    $region37: #{advanced_ctc_head.1} parent=1 // pred_fallthru
      _
    // Predicated region
    $region38: #{advanced_ctc_head.1} parent=1 // pred_check
      _
    $region39: #{advanced_ctc_head.1} parent=1 // pred_check_branch
      %202 = sbr.rel (0) target = $region41
    $region40: #{advanced_ctc_head.1} parent=1 // pred_region
      _
    $region41: #{advanced_ctc_head.1} parent=1 // pred_fallthru
      _
    %203 = vsyncpa [#allocation4], 1
    %204 = vsyncpa [#allocation6], 1

</llo_original>
